<compile_context>
chip_gen: v6e
topology: v6e:2x2x1
jax: 0.10.0
libtpu: 0.0.40
codegen_flags: <defaults>
</compile_context>

<pallas_src>
import functools

import jax
import jax.numpy as jnp
from jax.experimental import pallas as pl
from jax.experimental.pallas import tpu as pltpu

_BF16, _F32 = 2, 4


def _round_up(x, m):
    return (x + m - 1) // m * m


def _pick_tile_m(m, cap):
    """Largest sublane-aligned row tile <= cap that minimises zero-row padding."""
    m8 = _round_up(m, 8)
    if m8 <= cap:
        return m8
    n_tiles = -(-m8 // cap)                  # ceil
    return _round_up(-(-m8 // n_tiles), 8)


# ---------------------------------------------------------------------------
# kernels
# ---------------------------------------------------------------------------
def _ffn_resident_kernel(x_ref, w1_ref, b1_ref, w2_ref, b2_ref, o_ref):
    # x:(tm,Cp) bf16  w1:(Cp,Hp) bf16  b1:(1,Hp) f32  w2:(Hp,Cp) bf16
    # b2:(1,Cp) f32   o:(tm,Cp) f32
    h = jnp.dot(x_ref[...], w1_ref[...], preferred_element_type=jnp.float32)
    # Fused bias + ReLU (f32) + bf16 downcast: halves the hidden-activation
    # VMEM store/load traffic before the second matmul.
    h = jnp.maximum(h + b1_ref[...], 0.0).astype(jnp.bfloat16)
    y = jnp.dot(h, w2_ref[...], preferred_element_type=jnp.float32) + b2_ref[...]
    o_ref[...] = y.astype(o_ref.dtype)


def _ffn_htiled_kernel(x_ref, w1_ref, b1_ref, w2_ref, b2_ref, o_ref, acc_ref):
    # Hidden-dim tiled path: grid=(M_tiles, H_tiles), (tm, Cp) f32 accumulator.
    k = pl.program_id(1)

    @pl.when(k == 0)
    def _():
        acc_ref[...] = jnp.zeros_like(acc_ref)

    h = jnp.dot(x_ref[...], w1_ref[...], preferred_element_type=jnp.float32)
    h = jnp.maximum(h + b1_ref[...], 0.0).astype(jnp.bfloat16)
    acc_ref[...] += jnp.dot(h, w2_ref[...], preferred_element_type=jnp.float32)

    @pl.when(k == pl.num_programs(1) - 1)
    def _():
        o_ref[...] = (acc_ref[...] + b2_ref[...]).astype(o_ref.dtype)


# ---------------------------------------------------------------------------
# helpers
# ---------------------------------------------------------------------------
_SINGLE_BUFFER_OK = None


def _single_buffer_supported():
    """Check once whether pipeline_mode=pl.Buffered(1) compiles on this jax/TPU."""
    global _SINGLE_BUFFER_OK
    if _SINGLE_BUFFER_OK is not None:
        return _SINGLE_BUFFER_OK
    ok = False
    if hasattr(pl, "Buffered"):
        try:
            spec = pl.BlockSpec((8, 128), lambda i: (0, 0),
                                pipeline_mode=pl.Buffered(1))

            def _copy(x_ref, o_ref):
                o_ref[...] = x_ref[...]

            fn = pl.pallas_call(
                _copy,
                out_shape=jax.ShapeDtypeStruct((8, 128), jnp.float32),
                grid=(1,),
                in_specs=[spec],
                out_specs=pl.BlockSpec((8, 128), lambda i: (0, 0)),
            )
            jax.jit(fn).lower(jnp.zeros((8, 128), jnp.float32)).compile()
            ok = True
        except Exception:
            ok = False
    _SINGLE_BUFFER_OK = ok
    return ok


def _vmem_capacity_bytes():
    cap = None
    try:
        cap = getattr(pltpu.get_tpu_info(), "vmem_capacity_bytes", None)
    except Exception:
        cap = None
    if not cap:
        cap = 64 * 1024 * 1024        # conservative default: v7x per-TC VMEM
    return int(cap)


def _const_spec(shape, single_buffer):
    """BlockSpec with a constant index_map (VMEM-resident operand)."""
    index_map = lambda *_: (0,) * len(shape)
    if single_buffer:
        return pl.BlockSpec(shape, index_map, pipeline_mode=pl.Buffered(1))
    return pl.BlockSpec(shape, index_map)


def _resident_vmem_bytes(tm, cp, hp, single_buffer):
    wmult = 1 if single_buffer else 2
    return (wmult * 2 * cp * hp * _BF16          # w1 + w2 (bf16, resident)
            + wmult * (hp + cp) * _F32           # b1 + b2
            + 2 * tm * cp * _BF16                # x tile   (double-buffered)
            + 2 * tm * cp * _F32                 # out tile (double-buffered)
            + tm * hp * (_F32 + _BF16))          # hidden activation f32 + bf16


def _htiled_vmem_bytes(tm, th, cp, single_buffer):
    b2mult = 1 if single_buffer else 2
    return (2 * cp * th * _BF16 + 2 * th * cp * _BF16    # w1/w2 blocks (dbl-buf)
            + 2 * th * _F32 + b2mult * cp * _F32         # b1 block / b2
            + 2 * tm * cp * _BF16                        # x tile
            + 2 * tm * cp * _F32                         # out tile
            + tm * cp * _F32                             # accumulator scratch
            + tm * th * (_F32 + _BF16))                  # hidden block


# ---------------------------------------------------------------------------
# public API
# ---------------------------------------------------------------------------
def make_feed_forward(w1, b1, w2, b2, *, dropout_rate=0.0, training=False):
    """Build a jitted FeedForward forward pass.  Weights are padded + cast ONCE.

    w1: (C, 4C), b1: (4C,) or (1, 4C), w2: (4C, C), b2: (C,) or (1, C).
    Weights are stored (in, out), so the kernel computes x @ W + b
    (== torch's x @ W.T + b with torch's (out, in) storage).
    """
    if training and dropout_rate > 0.0:
        # TODO(synk): training-mode dropout (pltpu.prng_seed / prng_random_bits).
        raise NotImplementedError("training-mode dropout is not implemented")

    C, H = int(w1.shape[0]), int(w1.shape[1])
    Cp, Hp = _round_up(C, 128), _round_up(H, 128)

    b1 = jnp.asarray(b1, jnp.float32).reshape(1, H)
    b2 = jnp.asarray(b2, jnp.float32).reshape(1, C)

    # One-time pad + bf16 cast, hoisted out of the per-call hot path.
    w1_p = jnp.pad(jnp.asarray(w1), ((0, Cp - C), (0, Hp - H))).astype(jnp.bfloat16)
    b1_p = jnp.pad(b1, ((0, 0), (0, Hp - H)))
    w2_p = jnp.pad(jnp.asarray(w2), ((0, Hp - H), (0, Cp - C))).astype(jnp.bfloat16)
    b2_p = jnp.pad(b2, ((0, 0), (0, Cp - C)))

    single_buffer = _single_buffer_supported()
    vmem_cap = _vmem_capacity_bytes()           # per-TensorCore capacity
    vmem_budget = int(vmem_cap * 0.85)          # ~15% headroom for compiler scratch

    @functools.partial(jax.jit, static_argnames=("force_h_tiled",))
    def _fwd(x, w1_p, b1_p, w2_p, b2_p, force_h_tiled=False):
        B, T, Cx = x.shape
        assert Cx == C, f"expected last dim {C}, got {Cx}"
        M = B * T

        # ---- path + tile selection (static Python on static shapes) ------
        tm, use_resident, th = None, False, None
        if not force_h_tiled:
            for cap in (1024, 512, 256, 128):
                cand = _pick_tile_m(M, cap)
                if _resident_vmem_bytes(cand, Cp, Hp, single_buffer) <= vmem_budget:
                    tm, use_resident = cand, True
                    break
        if not use_resident:
            tm = _pick_tile_m(M, 512)
            th_opts = [t for t in (2048, 1024, 512, 256, 128) if Hp % t == 0]
            th = next((t for t in th_opts
                       if _htiled_vmem_bytes(tm, t, Cp, single_buffer) <= vmem_budget),
                      th_opts[-1])

        Mp = _round_up(M, tm)
        n_m = Mp // tm

        need = (_resident_vmem_bytes(tm, Cp, Hp, single_buffer) if use_resident
                else _htiled_vmem_bytes(tm, th, Cp, single_buffer))
        vmem_limit = int(min(vmem_cap * 0.9, max(1.5 * need, 32 * 1024 * 1024)))

        cost = pl.CostEstimate(
            flops=4 * Mp * Cp * Hp,
            transcendentals=0,
            bytes_accessed=(Mp * Cp * _BF16 + 2 * Cp * Hp * _BF16
                            + (Hp + Cp) * _F32 + Mp * Cp * _F32))

        x_p = jnp.pad(x.reshape(M, C).astype(jnp.bfloat16),
                      ((0, Mp - M), (0, Cp - C)))

        if use_resident:
            out_p = pl.pallas_call(
                _ffn_resident_kernel,
                out_shape=jax.ShapeDtypeStruct((Mp, Cp), jnp.float32),
                grid=(n_m,),
                in_specs=[
                    pl.BlockSpec((tm, Cp), lambda i: (i, 0)),  # x streamed over M
                    _const_spec((Cp, Hp), single_buffer),      # w1 VMEM-resident
                    _const_spec((1, Hp), single_buffer),       # b1
                    _const_spec((Hp, Cp), single_buffer),      # w2 VMEM-resident
                    _const_spec((1, Cp), single_buffer),       # b2
                ],
                out_specs=pl.BlockSpec((tm, Cp), lambda i: (i, 0)),
                compiler_params=pltpu.CompilerParams(
                    dimension_semantics=("parallel",),
                    vmem_limit_bytes=vmem_limit),
                cost_estimate=cost,
            )(x_p, w1_p, b1_p, w2_p, b2_p)
        else:
            n_k = Hp // th
            out_p = pl.pallas_call(
                _ffn_htiled_kernel,
                out_shape=jax.ShapeDtypeStruct((Mp, Cp), jnp.float32),
                grid=(n_m, n_k),
                in_specs=[
                    pl.BlockSpec((tm, Cp), lambda i, k: (i, 0)),  # x
                    pl.BlockSpec((Cp, th), lambda i, k: (0, k)),  # w1 column block
                    pl.BlockSpec((1, th), lambda i, k: (0, k)),   # b1 block
                    pl.BlockSpec((th, Cp), lambda i, k: (k, 0)),  # w2 row block
                    _const_spec((1, Cp), single_buffer),          # b2
                ],
                out_specs=pl.BlockSpec((tm, Cp), lambda i, k: (i, 0)),
                scratch_shapes=[pltpu.VMEM((tm, Cp), jnp.float32)],
                compiler_params=pltpu.CompilerParams(
                    dimension_semantics=("parallel", "arbitrary"),
                    vmem_limit_bytes=vmem_limit),
                cost_estimate=cost,
            )(x_p, w1_p, b1_p, w2_p, b2_p)

        # NOTE: output kept f32 to match the torch module's dtype; emit bf16
        # here instead if the consumer accepts it (halves the writeback DMA).
        return out_p[:M, :C].reshape(B, T, C)

    def feed_forward(x, *, force_h_tiled=False):
        return _fwd(x, w1_p, b1_p, w2_p, b2_p, force_h_tiled=force_h_tiled)

    return feed_forward


def init_params(key, n_embd):
    """Deterministic parameter init (shapes match the two nn.Linear layers)."""
    hidden = 4 * n_embd
    k1, k2, k3, k4 = jax.random.split(key, 4)
    bound1 = 1.0 / jnp.sqrt(n_embd)
    bound2 = 1.0 / jnp.sqrt(hidden)
    w1 = jax.random.uniform(k1, (n_embd, hidden), jnp.float32, -bound1, bound1)
    b1 = jax.random.uniform(k2, (hidden,), jnp.float32, -bound1, bound1)
    w2 = jax.random.uniform(k3, (hidden, n_embd), jnp.float32, -bound2, bound2)
    b2 = jax.random.uniform(k4, (n_embd,), jnp.float32, -bound2, bound2)
    return w1, b1, w2, b2


if __name__ == "__main__":
    key = jax.random.PRNGKey(0)
    B, T, n_embd = 2, 8, 32          # batch, seq, embedding dim
    dropout_rate = 0.1               # identity at eval time

    kx, kp = jax.random.split(key)
    x = jax.random.normal(kx, (B, T, n_embd), jnp.float32)
    w1, b1, w2, b2 = init_params(kp, n_embd)

    feed_forward = make_feed_forward(w1, b1, w2, b2, dropout_rate=dropout_rate)

    out = jax.block_until_ready(feed_forward(x))                      # resident path
    out_ht = jax.block_until_ready(feed_forward(x, force_h_tiled=True))  # fallback path

    # Reference in plain JAX, mirroring the kernel's precision choices
    # (bf16 matmul operands, f32 accumulation / bias / ReLU).
    xb = x.reshape(-1, n_embd).astype(jnp.bfloat16).astype(jnp.float32)
    w1b = w1.astype(jnp.bfloat16).astype(jnp.float32)
    w2b = w2.astype(jnp.bfloat16).astype(jnp.float32)
    h_ref = jnp.maximum(xb @ w1b + b1[None, :], 0.0)
    h_ref = h_ref.astype(jnp.bfloat16).astype(jnp.float32)
    ref = (h_ref @ w2b + b2[None, :]).reshape(B, T, n_embd)

    assert jnp.allclose(out, ref, atol=2e-2, rtol=2e-2), "resident path mismatch"
    assert jnp.allclose(out_ht, ref, atol=2e-2, rtol=2e-2), "h-tiled path mismatch"

    print("KERNEL_OK")
</pallas_src>

<mosaic_0001>
module attributes {stable_mosaic.version = 11 : i64} {
  func.func @_ffn_resident_kernel(%arg0: i32, %arg1: memref<16x128xbf16, #tpu.memory_space<vmem>>, %arg2: memref<128x128xbf16, #tpu.memory_space<vmem>>, %arg3: memref<1x128xf32, #tpu.memory_space<vmem>>, %arg4: memref<128x128xbf16, #tpu.memory_space<vmem>>, %arg5: memref<1x128xf32, #tpu.memory_space<vmem>>, %arg6: memref<16x128xf32, #tpu.memory_space<vmem>>) attributes {dimension_semantics = [#tpu.dimension_semantics<parallel>], iteration_bounds = array<i64: 1>, scalar_prefetch = 0 : i64, scratch_operands = 0 : i64, tpu.core_type = #tpu.core_type<tc>, window_params = [{transform_indices = @transform_0, window_bounds = array<i64: 16, 128>}, {pipeline_mode = #tpu.pipeline_mode<synchronous>, transform_indices = @transform_1, window_bounds = array<i64: 128, 128>}, {pipeline_mode = #tpu.pipeline_mode<synchronous>, transform_indices = @transform_2, window_bounds = array<i64: 1, 128>}, {pipeline_mode = #tpu.pipeline_mode<synchronous>, transform_indices = @transform_3, window_bounds = array<i64: 128, 128>}, {pipeline_mode = #tpu.pipeline_mode<synchronous>, transform_indices = @transform_4, window_bounds = array<i64: 1, 128>}, {transform_indices = @transform_5, window_bounds = array<i64: 16, 128>}]} {
    %c0 = arith.constant 0 : index
    %c0_0 = arith.constant 0 : index
    %0 = vector.load %arg1[%c0, %c0_0] : memref<16x128xbf16, #tpu.memory_space<vmem>>, vector<16x128xbf16>
    %c0_1 = arith.constant 0 : index
    %c0_2 = arith.constant 0 : index
    %1 = vector.load %arg2[%c0_1, %c0_2] : memref<128x128xbf16, #tpu.memory_space<vmem>>, vector<128x128xbf16>
    %cst = arith.constant dense<0.000000e+00> : vector<16x128xf32>
    %2 = tpu.matmul %0, %1, %cst {dimension_numbers = #tpu.dot_dimension_numbers<[1], [0], [0], [1], [0, 0, 1, 1], [], []>} : vector<16x128xbf16>, vector<128x128xbf16>, vector<16x128xf32> -> vector<16x128xf32>
    %c0_3 = arith.constant 0 : index
    %c0_4 = arith.constant 0 : index
    %3 = vector.load %arg3[%c0_3, %c0_4] : memref<1x128xf32, #tpu.memory_space<vmem>>, vector<1x128xf32>
    %4 = vector.broadcast %3 : vector<1x128xf32> to vector<16x128xf32>
    %5 = arith.addf %2, %4 : vector<16x128xf32>
    %cst_5 = arith.constant 0.000000e+00 : f32
    %6 = vector.broadcast %cst_5 : f32 to vector<16x128xf32>
    %7 = arith.maximumf %5, %6 : vector<16x128xf32>
    %8 = arith.truncf %7 : vector<16x128xf32> to vector<16x128xbf16>
    %c0_6 = arith.constant 0 : index
    %c0_7 = arith.constant 0 : index
    %9 = vector.load %arg4[%c0_6, %c0_7] : memref<128x128xbf16, #tpu.memory_space<vmem>>, vector<128x128xbf16>
    %cst_8 = arith.constant dense<0.000000e+00> : vector<16x128xf32>
    %10 = tpu.matmul %8, %9, %cst_8 {dimension_numbers = #tpu.dot_dimension_numbers<[1], [0], [0], [1], [0, 0, 1, 1], [], []>} : vector<16x128xbf16>, vector<128x128xbf16>, vector<16x128xf32> -> vector<16x128xf32>
    %c0_9 = arith.constant 0 : index
    %c0_10 = arith.constant 0 : index
    %11 = vector.load %arg5[%c0_9, %c0_10] : memref<1x128xf32, #tpu.memory_space<vmem>>, vector<1x128xf32>
    %12 = vector.broadcast %11 : vector<1x128xf32> to vector<16x128xf32>
    %13 = arith.addf %10, %12 : vector<16x128xf32>
    %c0_11 = arith.constant 0 : index
    %c0_12 = arith.constant 0 : index
    %14 = vector.load %arg6[%c0_11, %c0_12] : memref<16x128xf32, #tpu.memory_space<vmem>>, vector<16x128xf32>
    tpu.vector_store %arg6[%c0_11, %c0_12], %13 {strides = array<i32>} : memref<16x128xf32, #tpu.memory_space<vmem>>, vector<16x128xf32>,
    return
  }
  func.func @transform_0(%arg0: i32) -> (i32, i32) {
    %c0_i32 = arith.constant 0 : i32
    %c0_i32_0 = arith.constant 0 : i32
    return %arg0, %c0_i32 : i32, i32
  }
  func.func @transform_1(%arg0: i32) -> (i32, i32) {
    %c0_i32 = arith.constant 0 : i32
    %c0_i32_0 = arith.constant 0 : i32
    %c0_i32_1 = arith.constant 0 : i32
    return %c0_i32, %c0_i32_0 : i32, i32
  }
  func.func @transform_2(%arg0: i32) -> (i32, i32) {
    %c0_i32 = arith.constant 0 : i32
    %c0_i32_0 = arith.constant 0 : i32
    %c0_i32_1 = arith.constant 0 : i32
    return %c0_i32, %c0_i32_0 : i32, i32
  }
  func.func @transform_3(%arg0: i32) -> (i32, i32) {
    %c0_i32 = arith.constant 0 : i32
    %c0_i32_0 = arith.constant 0 : i32
    %c0_i32_1 = arith.constant 0 : i32
    return %c0_i32, %c0_i32_0 : i32, i32
  }
  func.func @transform_4(%arg0: i32) -> (i32, i32) {
    %c0_i32 = arith.constant 0 : i32
    %c0_i32_0 = arith.constant 0 : i32
    %c0_i32_1 = arith.constant 0 : i32
    return %c0_i32, %c0_i32_0 : i32, i32
  }
  func.func @transform_5(%arg0: i32) -> (i32, i32) {
    %c0_i32 = arith.constant 0 : i32
    %c0_i32_0 = arith.constant 0 : i32
    return %arg0, %c0_i32 : i32, i32
  }
}

</mosaic_0001>

<llo_original>
// kernel: _fwd.1
$region0: #{_fwd.1}
  #allocation0 [shape = 'u32[]', space=smem, size = 0x4, offset = 0x4, fixed_abs, tag = 'smem constant byte address 0x4 - core index']
  #allocation1 [shape = 'u32[144,128]{1,0:T(1,128)}', space=vmem, size = 0x12000, scoped, tag = 'internal scratch']
  %s0 = inlined_call_operand.vmem [shape: bf16[16,128], index: 0, kind: input, shape index: {}]
  %s1 = inlined_call_operand.hbm [shape: bf16[128,128], index: 1, kind: input, shape index: {}]
  %s2 = inlined_call_operand.vmem [shape: f32[1,128], index: 2, kind: input, shape index: {}]
  %s3 = inlined_call_operand.hbm [shape: bf16[128,128], index: 3, kind: input, shape index: {}]
  %s4 = inlined_call_operand.vmem [shape: f32[1,128], index: 4, kind: input, shape index: {}]
  %s5 = inlined_call_operand.vmem [shape: f32[16,128], index: 5, kind: output, shape index: {}]
  %s6 = sld [smem:[#allocation0]]
  $region38: #{_fwd.1} parent=0
    _
  %s8 = ssub.s32 1, %s6
  %s9 = scalar_select 0, %s8, %s6
  $region1: #{_fwd.1} parent=0
    #allocation2 [shape = 'u8[32768]{0}', space=vmem, size = 0x8000, scoped, tag = 'input window, operand 1, single buffered']
    #allocation3 [shape = 's32[1]{0}', space=sflag, size = 0x4, scoped, tag = 'scoped memory for _fwd.1']
    #allocation4 [shape = 'u8[32768]{0}', space=vmem, size = 0x8000, scoped, tag = 'input window, operand 3, single buffered']
    #allocation5 [shape = 's32[1]{0}', space=sflag, size = 0x4, scoped, tag = 'scoped memory for _fwd.1']
    %10 = vsyncpa [#allocation3], 0
    %11 = vsyncpa [#allocation5], 0
    // Predicated region
    $region2: #{_fwd.1} parent=1 // pred_check
      _
    $region3: #{_fwd.1} parent=1 // pred_check_branch
      %13 = sbr.rel (0) target = $region5
    $region4: #{_fwd.1} parent=1 // pred_region
      _
    $region5: #{_fwd.1} parent=1 // pred_fallthru
      _
    // Predicated region
    $region6: #{_fwd.1} parent=1 // pred_check
      _
    $region7: #{_fwd.1} parent=1 // pred_check_branch
      %15 = sbr.rel (0) target = $region9
    $region8: #{_fwd.1} parent=1 // pred_region
      %s17 = ssub.s32 1024, 1024
      %18 = vsyncadd [#allocation3], %s17
      %s19 = sshll.u32 [#allocation2], 4
      %s20 = int_to_ptr.vmem [resolvable:$true] %s19
      %25 = dma.hbm_to_vmem [thread:$0]  %s1, 1024, %s20, [#allocation3], 64, 64, 4
    $region9: #{_fwd.1} parent=1 // pred_fallthru
      _
    // Predicated region
    $region10: #{_fwd.1} parent=1 // pred_check
      _
    $region11: #{_fwd.1} parent=1 // pred_check_branch
      %27 = sbr.rel (0) target = $region13
    $region12: #{_fwd.1} parent=1 // pred_region
      _
    $region13: #{_fwd.1} parent=1 // pred_fallthru
      _
    // Predicated region
    $region14: #{_fwd.1} parent=1 // pred_check
      _
    $region15: #{_fwd.1} parent=1 // pred_check_branch
      %29 = sbr.rel (0) target = $region17
    $region16: #{_fwd.1} parent=1 // pred_region
      %s31 = ssub.s32 1024, 1024
      %32 = vsyncadd [#allocation5], %s31
      %s33 = sshll.u32 [#allocation4], 4
      %s34 = int_to_ptr.vmem [resolvable:$true] %s33
      %39 = dma.hbm_to_vmem [thread:$0]  %s3, 1024, %s34, [#allocation5], 64, 64, 4
    $region17: #{_fwd.1} parent=1 // pred_fallthru
      _
    // Predicated region
    $region18: #{_fwd.1} parent=1 // pred_check
      _
    $region19: #{_fwd.1} parent=1 // pred_check_branch
      %41 = sbr.rel (0) target = $region21
    $region20: #{_fwd.1} parent=1 // pred_region
      _
    $region21: #{_fwd.1} parent=1 // pred_fallthru
      _
    // Predicated region
    $region22: #{_fwd.1} parent=1 // pred_check
      _
    $region23: #{_fwd.1} parent=1 // pred_check_branch
      %43 = sbr.rel (0) target = $region25
    $region24: #{_fwd.1} parent=1 // pred_region
      %44 = dma.done [#allocation3], 1024
    $region25: #{_fwd.1} parent=1 // pred_fallthru
      _
    // Predicated region
    $region26: #{_fwd.1} parent=1 // pred_check
      _
    $region27: #{_fwd.1} parent=1 // pred_check_branch
      %46 = sbr.rel (0) target = $region29
    $region28: #{_fwd.1} parent=1 // pred_region
      %47 = dma.done [#allocation5], 1024
    $region29: #{_fwd.1} parent=1 // pred_fallthru
      _
    %v49 = vld [vmem:[%s0] sm:$0xf]
    %v50 = vld [vmem:[%s0 + $0x4] sm:$0xf]
    %v51 = vld [vmem:[#allocation2] sm:$0xf]
    %v52 = vld [vmem:[#allocation2 + $0x4] sm:$0xf]
    %v53 = vld [vmem:[#allocation2 + $0x8] sm:$0xf]
    %v54 = vld [vmem:[#allocation2 + $0xc] sm:$0xf]
    %v55 = vld [vmem:[#allocation2 + $0x10] sm:$0xf]
    %v56 = vld [vmem:[#allocation2 + $0x14] sm:$0xf]
    %v57 = vld [vmem:[#allocation2 + $0x18] sm:$0xf]
    %v58 = vld [vmem:[#allocation2 + $0x1c] sm:$0xf]
    %v59 = vld [vmem:[#allocation2 + $0x20] sm:$0xf]
    %v60 = vld [vmem:[#allocation2 + $0x24] sm:$0xf]
    %v61 = vld [vmem:[#allocation2 + $0x28] sm:$0xf]
    %v62 = vld [vmem:[#allocation2 + $0x2c] sm:$0xf]
    %v63 = vld [vmem:[#allocation2 + $0x30] sm:$0xf]
    %v64 = vld [vmem:[#allocation2 + $0x34] sm:$0xf]
    %v65 = vld [vmem:[#allocation2 + $0x38] sm:$0xf]
    %v66 = vld [vmem:[#allocation2 + $0x3c] sm:$0xf]
    %v67 = vld [vmem:[%s2] sm:$0x1]
    %v69 = vlaneseq
    %v70 = vshrl.u32 %v69, 7
    %v71 = vsub.s32 0, %v70
    %v72 = vrot.slane %v67, %v71
    %v76 = vunpack.c.l.b16 %v49
    %v77 = vunpack.c.l.b16 %v50
    %v78 = vpack.c.b16 %v77, %v76
    %v96 = vunpack.c.l.b16 %v51
    %v97 = vunpack.c.l.b16 %v52
    %v98 = vunpack.c.l.b16 %v53
    %v99 = vunpack.c.l.b16 %v54
    %v100 = vunpack.c.l.b16 %v55
    %v101 = vunpack.c.l.b16 %v56
    %v102 = vunpack.c.l.b16 %v57
    %v103 = vunpack.c.l.b16 %v58
    %v104 = vunpack.c.l.b16 %v59
    %v105 = vunpack.c.l.b16 %v60
    %v106 = vunpack.c.l.b16 %v61
    %v107 = vunpack.c.l.b16 %v62
    %v108 = vunpack.c.l.b16 %v63
    %v109 = vunpack.c.l.b16 %v64
    %v110 = vunpack.c.l.b16 %v65
    %v111 = vunpack.c.l.b16 %v66
    %v112 = vpack.c.b16 %v97, %v96
    %v113 = vpack.c.b16 %v99, %v98
    %v114 = vpack.c.b16 %v101, %v100
    %v115 = vpack.c.b16 %v103, %v102
    %v116 = vpack.c.b16 %v105, %v104
    %v117 = vpack.c.b16 %v107, %v106
    %v118 = vpack.c.b16 %v109, %v108
    %v119 = vpack.c.b16 %v111, %v110
    %128 = vmatprep.subr.bf16.mxu0 0
    %129 = vmatpush1.bf16.msra.mxu0 %v119
    %130 = vmatprep.subr.bf16.mxu0 0
    %131 = vmatpush1.bf16.msra.mxu0 %v118
    %132 = vmatprep.subr.bf16.mxu0 0
    %133 = vmatpush1.bf16.msra.mxu0 %v117
    %134 = vmatprep.subr.bf16.mxu0 0
    %135 = vmatpush1.bf16.msra.mxu0 %v116
    %136 = vmatprep.subr.bf16.mxu0 0
    %137 = vmatpush1.bf16.msra.mxu0 %v115
    %138 = vmatprep.subr.bf16.mxu0 0
    %139 = vmatpush1.bf16.msra.mxu0 %v114
    %140 = vmatprep.subr.bf16.mxu0 0
    %141 = vmatpush1.bf16.msra.mxu0 %v113
    %142 = vmatprep.subr.bf16.mxu0 0
    %143 = vmatpush1.bf16.msra.mxu0 %v112
    %144 = vmatprep.subr.bf16.mxu0 0
    %145 = vmatpush2.bf16.msra.mxu0 0
    %146 = vmatprep.subr.bf16.mxu0 0
    %147 = vmatpush2.bf16.msra.mxu0 0
    %148 = vmatprep.subr.bf16.mxu0 0
    %149 = vmatpush2.bf16.msra.mxu0 0
    %150 = vmatprep.subr.bf16.mxu0 0
    %151 = vmatpush2.bf16.msra.mxu0 0
    %152 = vmatprep.subr.bf16.mxu0 0
    %153 = vmatpush2.bf16.msra.mxu0 0
    %154 = vmatprep.subr.bf16.mxu0 0
    %155 = vmatpush2.bf16.msra.mxu0 0
    %156 = vmatprep.subr.bf16.mxu0 0
    %157 = vmatpush2.bf16.msra.mxu0 0
    %158 = vmatprep.subr.bf16.mxu0 0
    %159 = vmatpush2.bf16.msra.mxu0 0
    %160 = vmatprep.mubr.bf16.mxu0 0
    %161 = vmatmul.mubr.bf16.gmra.mxu0 %v78
    %v162 = vpop.f32.mrf.mxu0
    %v163 = vadd.f32 %v72, %v162
    %v164 = vpop.f32.mrf.mxu0
    %v165 = vpop.f32.mrf.mxu0
    %v166 = vadd.f32 %v72, %v165
    %v167 = vpop.f32.mrf.mxu0
    %168 = vdwg.mxu0
    %v169 = vmax.f32 %v163, 0.0
    %v170 = vmax.f32 %v166, 0.0
    %v171 = vpack.c.bf16 %v170, %v169
    %v172 = vld [vmem:[#allocation4] sm:$0xf]
    %v173 = vld [vmem:[#allocation4 + $0x4] sm:$0xf]
    %v174 = vld [vmem:[#allocation4 + $0x8] sm:$0xf]
    %v175 = vld [vmem:[#allocation4 + $0xc] sm:$0xf]
    %v176 = vld [vmem:[#allocation4 + $0x10] sm:$0xf]
    %v177 = vld [vmem:[#allocation4 + $0x14] sm:$0xf]
    %v178 = vld [vmem:[#allocation4 + $0x18] sm:$0xf]
    %v179 = vld [vmem:[#allocation4 + $0x1c] sm:$0xf]
    %v180 = vld [vmem:[#allocation4 + $0x20] sm:$0xf]
    %v181 = vld [vmem:[#allocation4 + $0x24] sm:$0xf]
    %v182 = vld [vmem:[#allocation4 + $0x28] sm:$0xf]
    %v183 = vld [vmem:[#allocation4 + $0x2c] sm:$0xf]
    %v184 = vld [vmem:[#allocation4 + $0x30] sm:$0xf]
    %v185 = vld [vmem:[#allocation4 + $0x34] sm:$0xf]
    %v186 = vld [vmem:[#allocation4 + $0x38] sm:$0xf]
    %v187 = vld [vmem:[#allocation4 + $0x3c] sm:$0xf]
    %v188 = vld [vmem:[%s4] sm:$0x1]
    %v190 = vlaneseq
    %v191 = vshrl.u32 %v190, 7
    %v192 = vsub.s32 0, %v191
    %v193 = vrot.slane %v188, %v192
    %v211 = vunpack.c.l.b16 %v172
    %v212 = vunpack.c.l.b16 %v173
    %v213 = vunpack.c.l.b16 %v174
    %v214 = vunpack.c.l.b16 %v175
    %v215 = vunpack.c.l.b16 %v176
    %v216 = vunpack.c.l.b16 %v177
    %v217 = vunpack.c.l.b16 %v178
    %v218 = vunpack.c.l.b16 %v179
    %v219 = vunpack.c.l.b16 %v180
    %v220 = vunpack.c.l.b16 %v181
    %v221 = vunpack.c.l.b16 %v182
    %v222 = vunpack.c.l.b16 %v183
    %v223 = vunpack.c.l.b16 %v184
    %v224 = vunpack.c.l.b16 %v185
    %v225 = vunpack.c.l.b16 %v186
    %v226 = vunpack.c.l.b16 %v187
    %v227 = vpack.c.b16 %v212, %v211
    %v228 = vpack.c.b16 %v214, %v213
    %v229 = vpack.c.b16 %v216, %v215
    %v230 = vpack.c.b16 %v218, %v217
    %v231 = vpack.c.b16 %v220, %v219
    %v232 = vpack.c.b16 %v222, %v221
    %v233 = vpack.c.b16 %v224, %v223
    %v234 = vpack.c.b16 %v226, %v225
    %243 = vmatprep.subr.bf16.mxu0 0
    %244 = vmatpush1.bf16.msra.mxu0 %v234
    %245 = vmatprep.subr.bf16.mxu0 0
    %246 = vmatpush1.bf16.msra.mxu0 %v233
    %247 = vmatprep.subr.bf16.mxu0 0
    %248 = vmatpush1.bf16.msra.mxu0 %v232
    %249 = vmatprep.subr.bf16.mxu0 0
    %250 = vmatpush1.bf16.msra.mxu0 %v231
    %251 = vmatprep.subr.bf16.mxu0 0
    %252 = vmatpush1.bf16.msra.mxu0 %v230
    %253 = vmatprep.subr.bf16.mxu0 0
    %254 = vmatpush1.bf16.msra.mxu0 %v229
    %255 = vmatprep.subr.bf16.mxu0 0
    %256 = vmatpush1.bf16.msra.mxu0 %v228
    %257 = vmatprep.subr.bf16.mxu0 0
    %258 = vmatpush1.bf16.msra.mxu0 %v227
    %259 = vmatprep.subr.bf16.mxu0 0
    %260 = vmatpush2.bf16.msra.mxu0 0
    %261 = vmatprep.subr.bf16.mxu0 0
    %262 = vmatpush2.bf16.msra.mxu0 0
    %263 = vmatprep.subr.bf16.mxu0 0
    %264 = vmatpush2.bf16.msra.mxu0 0
    %265 = vmatprep.subr.bf16.mxu0 0
    %266 = vmatpush2.bf16.msra.mxu0 0
    %267 = vmatprep.subr.bf16.mxu0 0
    %268 = vmatpush2.bf16.msra.mxu0 0
    %269 = vmatprep.subr.bf16.mxu0 0
    %270 = vmatpush2.bf16.msra.mxu0 0
    %271 = vmatprep.subr.bf16.mxu0 0
    %272 = vmatpush2.bf16.msra.mxu0 0
    %273 = vmatprep.subr.bf16.mxu0 0
    %274 = vmatpush2.bf16.msra.mxu0 0
    %275 = vmatprep.mubr.bf16.mxu0 0
    %276 = vmatmul.mubr.bf16.gmra.mxu0 %v171
    %v277 = vpop.f32.mrf.mxu0
    %v278 = vadd.f32 %v193, %v277
    %v279 = vpop.f32.mrf.mxu0
    %v280 = vpop.f32.mrf.mxu0
    %v281 = vadd.f32 %v193, %v280
    %v282 = vpop.f32.mrf.mxu0
    %283 = vdwg.mxu0
    %284 = vst [vmem:[%s5] sm:$0xff] %v278
    %285 = vst [vmem:[%s5 + $0x8] sm:$0xff] %v281
    // Predicated region
    $region30: #{_fwd.1} parent=1 // pred_check
      _
    $region31: #{_fwd.1} parent=1 // pred_check_branch
      %287 = sbr.rel (0) target = $region33
    $region32: #{_fwd.1} parent=1 // pred_region
      _
    $region33: #{_fwd.1} parent=1 // pred_fallthru
      _
    // Predicated region
    $region34: #{_fwd.1} parent=1 // pred_check
      _
    $region35: #{_fwd.1} parent=1 // pred_check_branch
      %289 = sbr.rel (0) target = $region37
    $region36: #{_fwd.1} parent=1 // pred_region
      _
    $region37: #{_fwd.1} parent=1 // pred_fallthru
      _
    %290 = vsyncpa [#allocation3], 1
    %291 = vsyncpa [#allocation5], 1

</llo_original>
